<compile_context>
chip_gen: v7x
topology: tpu7x:2x2x1
jax: 0.10.0
libtpu: 0.0.40
codegen_flags: <defaults>
</compile_context>

<pallas_src>
import jax
import jax.numpy as jnp
from jax.experimental import pallas as pl
from jax.experimental.pallas import tpu as pltpu


def _round_up(x, m):
    return ((x + m - 1) // m) * m


# ----------------------------- Pallas kernel -------------------------------
def qacd_fused_kernel(x_ref,
                      w0_ref, b0_ref, w1_ref, b1_ref, w2_ref, b2_ref,
                      w3_ref, b3_ref, w4_ref, b4_ref,
                      o_ref):
    """One batch tile: fused actor+critic 5-layer MLP on block-diag packed weights.

    MXU inputs bf16, accumulation f32 (preferred_element_type); bias-add/ReLU in f32
    (portable to v5e), carried activation re-packed to bf16 between layers.
    """
    h = x_ref[...]                                            # already bf16
    h = jnp.dot(h, w0_ref[...], preferred_element_type=jnp.float32)
    h = jnp.maximum(h + b0_ref[...], 0.0).astype(jnp.bfloat16)
    h = jnp.dot(h, w1_ref[...], preferred_element_type=jnp.float32)
    h = jnp.maximum(h + b1_ref[...], 0.0).astype(jnp.bfloat16)
    h = jnp.dot(h, w2_ref[...], preferred_element_type=jnp.float32)
    h = jnp.maximum(h + b2_ref[...], 0.0).astype(jnp.bfloat16)
    h = jnp.dot(h, w3_ref[...], preferred_element_type=jnp.float32)
    h = jnp.maximum(h + b3_ref[...], 0.0).astype(jnp.bfloat16)
    h = jnp.dot(h, w4_ref[...], preferred_element_type=jnp.float32)
    o_ref[...] = (h + b4_ref[...]).astype(o_ref.dtype)        # bf16 lane-dense slab


def fused_forward(obs, packed, out_pad):
    """obs: (B, obs_dim) f32.  packed: 5 x (W bf16 (K,N), b f32 (1,N)).

    Returns a lane-dense (B, out_pad) bf16 slab: [:, :A] actor logits, [:, A:2A] critic q.
    """
    B, obs_dim = obs.shape
    obs = obs.astype(jnp.bfloat16)       # one-time cast in wrapper halves input DMA

    # Tile choice: amortize the ~0.35us/step overhead with large batch tiles, but keep
    # >= 2 grid programs at large B so v7x's 2 TensorCores both get work.
    if B <= 256:
        block_b = B                      # single full-extent block: no pad, no masking
    else:
        block_b = min(1024, _round_up(pl.cdiv(B, 2), 8))
    n_blocks = pl.cdiv(B, block_b)       # partial last block: OOB loads/stores masked

    flat_args = [obs]
    in_specs = [pl.BlockSpec((block_b, obs_dim), lambda i: (i, 0))]
    for w, b in packed:
        flat_args += [w, b]
        # Weights / biases stay resident across the batch grid (constant index_map).
        # TODO(synk): pl.Buffered(1) on these would drop their second VMEM buffer
        # (~270 KiB) and shorten the prologue; skipped to avoid lowering-compat risk.
        in_specs += [pl.BlockSpec(w.shape, lambda i: (0, 0)),
                     pl.BlockSpec(b.shape, lambda i: (0, 0))]

    rows = n_blocks * block_b
    flops = 2 * rows * sum(int(w.shape[0]) * int(w.shape[1]) for w, _ in packed)
    bytes_accessed = (sum(int(w.size) * w.dtype.itemsize + int(b.size) * b.dtype.itemsize
                          for w, b in packed)
                      + B * obs_dim * 2 + B * out_pad * 2)

    return pl.pallas_call(
        qacd_fused_kernel,
        out_shape=jax.ShapeDtypeStruct((B, out_pad), jnp.bfloat16),
        grid=(n_blocks,),
        in_specs=in_specs,
        out_specs=pl.BlockSpec((block_b, out_pad), lambda i: (i, 0)),
        compiler_params=pltpu.CompilerParams(dimension_semantics=("parallel",)),
        cost_estimate=pl.CostEstimate(flops=flops, transcendentals=0,
                                      bytes_accessed=bytes_accessed),
    )(*flat_args)


# --------------------------- parameter creation -----------------------------
def make_linear(key, fan_in, fan_out):
    """Deterministic init (Kaiming-uniform-ish like torch.nn.Linear), f32."""
    kw, kb = jax.random.split(key)
    bound = 1.0 / jnp.sqrt(float(fan_in))
    w = jax.random.uniform(kw, (fan_in, fan_out), jnp.float32, -bound, bound)
    b = jax.random.uniform(kb, (1, fan_out), jnp.float32, -bound, bound)
    return w, b


def make_branch_params(key, obs_dim, hidden_list, head_hidden, action_dim):
    """FCEncoder(obs->hidden_list) + Head(MLP(head_hidden) + Linear(head_hidden, A))."""
    dims = [obs_dim] + list(hidden_list) + [head_hidden, action_dim]
    keys = jax.random.split(key, len(dims) - 1)
    return [make_linear(k, dims[i], dims[i + 1]) for i, k in enumerate(keys)]


def _block_diag(wa, wc):
    top = jnp.concatenate([wa, jnp.zeros((wa.shape[0], wc.shape[1]), wa.dtype)], axis=1)
    bot = jnp.concatenate([jnp.zeros((wc.shape[0], wa.shape[1]), wc.dtype), wc], axis=1)
    return jnp.concatenate([top, bot], axis=0)


def pack_branches(actor_params, critic_params, out_pad):
    """Pack actor+critic into block-diag weights so each layer is ONE matmul.

    Layer shapes become: (obs,256), (256,256), (256,128), (128,128), (128,out_pad).
    Weights cast to bf16 (MXU inputs); biases kept f32.
    """
    assert 2 * actor_params[-1][0].shape[1] <= out_pad, "out_pad too small for 2*A"
    packed = []
    n_layers = len(actor_params)
    for li, ((wa, ba), (wc, bc)) in enumerate(zip(actor_params, critic_params)):
        if li == 0:
            w = jnp.concatenate([wa, wc], axis=1)     # shared obs input -> column concat
        else:
            w = _block_diag(wa, wc)
        b = jnp.concatenate([ba, bc], axis=1)
        if li == n_layers - 1:
            pad = out_pad - w.shape[1]                # lane-dense final store
            w = jnp.pad(w, ((0, 0), (0, pad)))
            b = jnp.pad(b, ((0, 0), (0, pad)))
        packed.append((w.astype(jnp.bfloat16), b.astype(jnp.float32)))
    return packed


# ------------------------------- QACD model ---------------------------------
class QACDPallas:
    def __init__(self, key, obs_shape, action_shape,
                 encoder_hidden_size_list=(128, 128, 64),
                 actor_head_hidden_size=64, critic_head_hidden_size=64):
        self.action_shape = action_shape
        self.out_pad = max(128, _round_up(2 * action_shape, 128))
        k_actor, k_critic = jax.random.split(key)
        self.actor_params = make_branch_params(
            k_actor, obs_shape, encoder_hidden_size_list,
            actor_head_hidden_size, action_shape)
        self.critic_params = make_branch_params(
            k_critic, obs_shape, encoder_hidden_size_list,
            critic_head_hidden_size, action_shape)
        self.packed_params = pack_branches(self.actor_params, self.critic_params,
                                           self.out_pad)

    def _fused(self, obs):
        return fused_forward(obs, self.packed_params, self.out_pad)

    def compute_both(self, obs):
        """One pallas_call producing both heads (preferred when both are needed)."""
        slab = self._fused(obs)
        a = self.action_shape
        return {'logit': slab[:, :a].astype(jnp.float32),
                'q_value': slab[:, a:2 * a].astype(jnp.float32)}

    def compute_actor(self, obs):
        return {'logit': self._fused(obs)[:, :self.action_shape].astype(jnp.float32)}

    def compute_critic(self, inputs):
        a = self.action_shape
        return {'q_value': self._fused(inputs['obs'])[:, a:2 * a].astype(jnp.float32)}

    def forward(self, inputs, mode):
        assert mode in ('compute_actor', 'compute_critic')
        return getattr(self, mode)(inputs)


# ---------------------------- pure-JAX reference ----------------------------
def ref_branch_bf16(x, params):
    """Mirrors kernel numerics: bf16 matmul inputs, f32 accumulation, f32 bias/ReLU,
    bf16 rounding of the final store."""
    h = x
    for i, (w, b) in enumerate(params):
        h = jnp.dot(h.astype(jnp.bfloat16), w.astype(jnp.bfloat16),
                    preferred_element_type=jnp.float32) + b
        if i < len(params) - 1:
            h = jnp.maximum(h, 0.0)
    return h.astype(jnp.bfloat16).astype(jnp.float32)


# --------------------------------- main --------------------------------------
if __name__ == "__main__":
    key = jax.random.PRNGKey(0)
    k_model, k_obs = jax.random.split(key)

    B, OBS, ACT = 4, 16, 6
    model = QACDPallas(k_model, obs_shape=OBS, action_shape=ACT)
    obs = jax.random.normal(k_obs, (B, OBS), jnp.float32)

    # single fused pallas_call computing both heads
    both = model.compute_both(obs)
    logit = jax.block_until_ready(both['logit'])
    q_value = jax.block_until_ready(both['q_value'])
    assert logit.shape == (B, ACT)
    assert q_value.shape == (B, ACT)

    # individual-mode API (each still one fused call, slice differs)
    actor_out = model.forward(obs, 'compute_actor')
    critic_out = model.forward({'obs': obs}, 'compute_critic')
    assert jnp.allclose(actor_out['logit'], logit, atol=1e-6)
    assert jnp.allclose(critic_out['q_value'], q_value, atol=1e-6)

    # numerical check vs pure-JAX reference mirroring the bf16-matmul numerics
    ref_logit = ref_branch_bf16(obs, model.actor_params)
    ref_q = ref_branch_bf16(obs, model.critic_params)
    assert jnp.allclose(logit, ref_logit, atol=2e-2, rtol=2e-2)
    assert jnp.allclose(q_value, ref_q, atol=2e-2, rtol=2e-2)

    print("KERNEL_OK")
</pallas_src>

<mosaic_0001>
module attributes {stable_mosaic.version = 11 : i64} {
  func.func @qacd_fused_kernel(%arg0: i32, %arg1: memref<4x16xbf16, #tpu.memory_space<vmem>>, %arg2: memref<16x256xbf16, #tpu.memory_space<vmem>>, %arg3: memref<1x256xf32, #tpu.memory_space<vmem>>, %arg4: memref<256x256xbf16, #tpu.memory_space<vmem>>, %arg5: memref<1x256xf32, #tpu.memory_space<vmem>>, %arg6: memref<256x128xbf16, #tpu.memory_space<vmem>>, %arg7: memref<1x128xf32, #tpu.memory_space<vmem>>, %arg8: memref<128x128xbf16, #tpu.memory_space<vmem>>, %arg9: memref<1x128xf32, #tpu.memory_space<vmem>>, %arg10: memref<128x128xbf16, #tpu.memory_space<vmem>>, %arg11: memref<1x128xf32, #tpu.memory_space<vmem>>, %arg12: memref<4x128xbf16, #tpu.memory_space<vmem>>) attributes {dimension_semantics = [#tpu.dimension_semantics<parallel>], iteration_bounds = array<i64: 1>, scalar_prefetch = 0 : i64, scratch_operands = 0 : i64, tpu.core_type = #tpu.core_type<tc>, window_params = [{transform_indices = @transform_0, window_bounds = array<i64: 4, 16>}, {pipeline_mode = #tpu.pipeline_mode<synchronous>, transform_indices = @transform_1, window_bounds = array<i64: 16, 256>}, {pipeline_mode = #tpu.pipeline_mode<synchronous>, transform_indices = @transform_2, window_bounds = array<i64: 1, 256>}, {pipeline_mode = #tpu.pipeline_mode<synchronous>, transform_indices = @transform_3, window_bounds = array<i64: 256, 256>}, {pipeline_mode = #tpu.pipeline_mode<synchronous>, transform_indices = @transform_4, window_bounds = array<i64: 1, 256>}, {pipeline_mode = #tpu.pipeline_mode<synchronous>, transform_indices = @transform_5, window_bounds = array<i64: 256, 128>}, {pipeline_mode = #tpu.pipeline_mode<synchronous>, transform_indices = @transform_6, window_bounds = array<i64: 1, 128>}, {pipeline_mode = #tpu.pipeline_mode<synchronous>, transform_indices = @transform_7, window_bounds = array<i64: 128, 128>}, {pipeline_mode = #tpu.pipeline_mode<synchronous>, transform_indices = @transform_8, window_bounds = array<i64: 1, 128>}, {pipeline_mode = #tpu.pipeline_mode<synchronous>, transform_indices = @transform_9, window_bounds = array<i64: 128, 128>}, {pipeline_mode = #tpu.pipeline_mode<synchronous>, transform_indices = @transform_10, window_bounds = array<i64: 1, 128>}, {transform_indices = @transform_11, window_bounds = array<i64: 4, 128>}]} {
    %c0 = arith.constant 0 : index
    %c0_0 = arith.constant 0 : index
    %0 = vector.load %arg1[%c0, %c0_0] : memref<4x16xbf16, #tpu.memory_space<vmem>>, vector<4x16xbf16>
    %c0_1 = arith.constant 0 : index
    %c0_2 = arith.constant 0 : index
    %1 = vector.load %arg2[%c0_1, %c0_2] : memref<16x256xbf16, #tpu.memory_space<vmem>>, vector<16x256xbf16>
    %cst = arith.constant dense<0.000000e+00> : vector<4x256xf32>
    %2 = tpu.matmul %0, %1, %cst {dimension_numbers = #tpu.dot_dimension_numbers<[1], [0], [0], [1], [0, 0, 1, 1], [], []>} : vector<4x16xbf16>, vector<16x256xbf16>, vector<4x256xf32> -> vector<4x256xf32>
    %c0_3 = arith.constant 0 : index
    %c0_4 = arith.constant 0 : index
    %3 = vector.load %arg3[%c0_3, %c0_4] : memref<1x256xf32, #tpu.memory_space<vmem>>, vector<1x256xf32>
    %4 = vector.broadcast %3 : vector<1x256xf32> to vector<4x256xf32>
    %5 = arith.addf %2, %4 : vector<4x256xf32>
    %cst_5 = arith.constant 0.000000e+00 : f32
    %6 = vector.broadcast %cst_5 : f32 to vector<4x256xf32>
    %7 = arith.maximumf %5, %6 : vector<4x256xf32>
    %8 = arith.truncf %7 : vector<4x256xf32> to vector<4x256xbf16>
    %c0_6 = arith.constant 0 : index
    %c0_7 = arith.constant 0 : index
    %9 = vector.load %arg4[%c0_6, %c0_7] : memref<256x256xbf16, #tpu.memory_space<vmem>>, vector<256x256xbf16>
    %cst_8 = arith.constant dense<0.000000e+00> : vector<4x256xf32>
    %10 = tpu.matmul %8, %9, %cst_8 {dimension_numbers = #tpu.dot_dimension_numbers<[1], [0], [0], [1], [0, 0, 1, 1], [], []>} : vector<4x256xbf16>, vector<256x256xbf16>, vector<4x256xf32> -> vector<4x256xf32>
    %c0_9 = arith.constant 0 : index
    %c0_10 = arith.constant 0 : index
    %11 = vector.load %arg5[%c0_9, %c0_10] : memref<1x256xf32, #tpu.memory_space<vmem>>, vector<1x256xf32>
    %12 = vector.broadcast %11 : vector<1x256xf32> to vector<4x256xf32>
    %13 = arith.addf %10, %12 : vector<4x256xf32>
    %cst_11 = arith.constant 0.000000e+00 : f32
    %14 = vector.broadcast %cst_11 : f32 to vector<4x256xf32>
    %15 = arith.maximumf %13, %14 : vector<4x256xf32>
    %16 = arith.truncf %15 : vector<4x256xf32> to vector<4x256xbf16>
    %c0_12 = arith.constant 0 : index
    %c0_13 = arith.constant 0 : index
    %17 = vector.load %arg6[%c0_12, %c0_13] : memref<256x128xbf16, #tpu.memory_space<vmem>>, vector<256x128xbf16>
    %cst_14 = arith.constant dense<0.000000e+00> : vector<4x128xf32>
    %18 = tpu.matmul %16, %17, %cst_14 {dimension_numbers = #tpu.dot_dimension_numbers<[1], [0], [0], [1], [0, 0, 1, 1], [], []>} : vector<4x256xbf16>, vector<256x128xbf16>, vector<4x128xf32> -> vector<4x128xf32>
    %c0_15 = arith.constant 0 : index
    %c0_16 = arith.constant 0 : index
    %19 = vector.load %arg7[%c0_15, %c0_16] : memref<1x128xf32, #tpu.memory_space<vmem>>, vector<1x128xf32>
    %20 = vector.broadcast %19 : vector<1x128xf32> to vector<4x128xf32>
    %21 = arith.addf %18, %20 : vector<4x128xf32>
    %cst_17 = arith.constant 0.000000e+00 : f32
    %22 = vector.broadcast %cst_17 : f32 to vector<4x128xf32>
    %23 = arith.maximumf %21, %22 : vector<4x128xf32>
    %24 = arith.truncf %23 : vector<4x128xf32> to vector<4x128xbf16>
    %c0_18 = arith.constant 0 : index
    %c0_19 = arith.constant 0 : index
    %25 = vector.load %arg8[%c0_18, %c0_19] : memref<128x128xbf16, #tpu.memory_space<vmem>>, vector<128x128xbf16>
    %cst_20 = arith.constant dense<0.000000e+00> : vector<4x128xf32>
    %26 = tpu.matmul %24, %25, %cst_20 {dimension_numbers = #tpu.dot_dimension_numbers<[1], [0], [0], [1], [0, 0, 1, 1], [], []>} : vector<4x128xbf16>, vector<128x128xbf16>, vector<4x128xf32> -> vector<4x128xf32>
    %c0_21 = arith.constant 0 : index
    %c0_22 = arith.constant 0 : index
    %27 = vector.load %arg9[%c0_21, %c0_22] : memref<1x128xf32, #tpu.memory_space<vmem>>, vector<1x128xf32>
    %28 = vector.broadcast %27 : vector<1x128xf32> to vector<4x128xf32>
    %29 = arith.addf %26, %28 : vector<4x128xf32>
    %cst_23 = arith.constant 0.000000e+00 : f32
    %30 = vector.broadcast %cst_23 : f32 to vector<4x128xf32>
    %31 = arith.maximumf %29, %30 : vector<4x128xf32>
    %32 = arith.truncf %31 : vector<4x128xf32> to vector<4x128xbf16>
    %c0_24 = arith.constant 0 : index
    %c0_25 = arith.constant 0 : index
    %33 = vector.load %arg10[%c0_24, %c0_25] : memref<128x128xbf16, #tpu.memory_space<vmem>>, vector<128x128xbf16>
    %cst_26 = arith.constant dense<0.000000e+00> : vector<4x128xf32>
    %34 = tpu.matmul %32, %33, %cst_26 {dimension_numbers = #tpu.dot_dimension_numbers<[1], [0], [0], [1], [0, 0, 1, 1], [], []>} : vector<4x128xbf16>, vector<128x128xbf16>, vector<4x128xf32> -> vector<4x128xf32>
    %c0_27 = arith.constant 0 : index
    %c0_28 = arith.constant 0 : index
    %35 = vector.load %arg11[%c0_27, %c0_28] : memref<1x128xf32, #tpu.memory_space<vmem>>, vector<1x128xf32>
    %36 = vector.broadcast %35 : vector<1x128xf32> to vector<4x128xf32>
    %37 = arith.addf %34, %36 : vector<4x128xf32>
    %38 = arith.truncf %37 : vector<4x128xf32> to vector<4x128xbf16>
    %c0_29 = arith.constant 0 : index
    %c0_30 = arith.constant 0 : index
    %39 = vector.load %arg12[%c0_29, %c0_30] : memref<4x128xbf16, #tpu.memory_space<vmem>>, vector<4x128xbf16>
    tpu.vector_store %arg12[%c0_29, %c0_30], %38 {strides = array<i32>} : memref<4x128xbf16, #tpu.memory_space<vmem>>, vector<4x128xbf16>,
    return
  }
  func.func @transform_0(%arg0: i32) -> (i32, i32) {
    %c0_i32 = arith.constant 0 : i32
    %c0_i32_0 = arith.constant 0 : i32
    return %arg0, %c0_i32 : i32, i32
  }
  func.func @transform_1(%arg0: i32) -> (i32, i32) {
    %c0_i32 = arith.constant 0 : i32
    %c0_i32_0 = arith.constant 0 : i32
    %c0_i32_1 = arith.constant 0 : i32
    return %c0_i32, %c0_i32_0 : i32, i32
  }
  func.func @transform_2(%arg0: i32) -> (i32, i32) {
    %c0_i32 = arith.constant 0 : i32
    %c0_i32_0 = arith.constant 0 : i32
    %c0_i32_1 = arith.constant 0 : i32
    return %c0_i32, %c0_i32_0 : i32, i32
  }
  func.func @transform_3(%arg0: i32) -> (i32, i32) {
    %c0_i32 = arith.constant 0 : i32
    %c0_i32_0 = arith.constant 0 : i32
    %c0_i32_1 = arith.constant 0 : i32
    return %c0_i32, %c0_i32_0 : i32, i32
  }
  func.func @transform_4(%arg0: i32) -> (i32, i32) {
    %c0_i32 = arith.constant 0 : i32
    %c0_i32_0 = arith.constant 0 : i32
    %c0_i32_1 = arith.constant 0 : i32
    return %c0_i32, %c0_i32_0 : i32, i32
  }
  func.func @transform_5(%arg0: i32) -> (i32, i32) {
    %c0_i32 = arith.constant 0 : i32
    %c0_i32_0 = arith.constant 0 : i32
    %c0_i32_1 = arith.constant 0 : i32
    return %c0_i32, %c0_i32_0 : i32, i32
  }
  func.func @transform_6(%arg0: i32) -> (i32, i32) {
    %c0_i32 = arith.constant 0 : i32
    %c0_i32_0 = arith.constant 0 : i32
    %c0_i32_1 = arith.constant 0 : i32
    return %c0_i32, %c0_i32_0 : i32, i32
  }
  func.func @transform_7(%arg0: i32) -> (i32, i32) {
    %c0_i32 = arith.constant 0 : i32
    %c0_i32_0 = arith.constant 0 : i32
    %c0_i32_1 = arith.constant 0 : i32
    return %c0_i32, %c0_i32_0 : i32, i32
  }
  func.func @transform_8(%arg0: i32) -> (i32, i32) {
    %c0_i32 = arith.constant 0 : i32
    %c0_i32_0 = arith.constant 0 : i32
    %c0_i32_1 = arith.constant 0 : i32
    return %c0_i32, %c0_i32_0 : i32, i32
  }
  func.func @transform_9(%arg0: i32) -> (i32, i32) {
    %c0_i32 = arith.constant 0 : i32
    %c0_i32_0 = arith.constant 0 : i32
    %c0_i32_1 = arith.constant 0 : i32
    return %c0_i32, %c0_i32_0 : i32, i32
  }
  func.func @transform_10(%arg0: i32) -> (i32, i32) {
    %c0_i32 = arith.constant 0 : i32
    %c0_i32_0 = arith.constant 0 : i32
    %c0_i32_1 = arith.constant 0 : i32
    return %c0_i32, %c0_i32_0 : i32, i32
  }
  func.func @transform_11(%arg0: i32) -> (i32, i32) {
    %c0_i32 = arith.constant 0 : i32
    %c0_i32_0 = arith.constant 0 : i32
    return %arg0, %c0_i32 : i32, i32
  }
}

</mosaic_0001>

<llo_original>
// kernel: tpu_custom_call.1
$region0: #{tpu_custom_call.1}
  #allocation0 [shape = 'u32[]', space=smem, size = 0x4, offset = 0x4, fixed_abs, tag = 'smem constant byte address 0x4 - core index']
  #allocation1 [shape = 'u32[144,128]{1,0:T(1,128)}', space=vmem, size = 0x12000, scoped, tag = 'internal scratch']
  %s0 = inlined_call_operand.hbm [shape: bf16[4,16], index: 0, kind: input, shape index: {}]
  %s1 = inlined_call_operand.hbm [shape: bf16[16,256], index: 1, kind: input, shape index: {}]
  %s2 = inlined_call_operand.vmem [shape: f32[1,256], index: 2, kind: input, shape index: {}]
  %s3 = inlined_call_operand.hbm [shape: bf16[256,256], index: 3, kind: input, shape index: {}]
  %s4 = inlined_call_operand.vmem [shape: f32[1,256], index: 4, kind: input, shape index: {}]
  %s5 = inlined_call_operand.hbm [shape: bf16[256,128], index: 5, kind: input, shape index: {}]
  %s6 = inlined_call_operand.vmem [shape: f32[1,128], index: 6, kind: input, shape index: {}]
  %s7 = inlined_call_operand.hbm [shape: bf16[128,128], index: 7, kind: input, shape index: {}]
  %s8 = inlined_call_operand.vmem [shape: f32[1,128], index: 8, kind: input, shape index: {}]
  %s9 = inlined_call_operand.hbm [shape: bf16[128,128], index: 9, kind: input, shape index: {}]
  %s10 = inlined_call_operand.vmem [shape: f32[1,128], index: 10, kind: input, shape index: {}]
  %s11 = inlined_call_operand.hbm [shape: bf16[4,128], index: 11, kind: output, shape index: {}]
  %s12 = sld [smem:[#allocation0]]
  $region78: #{tpu_custom_call.1} parent=0
    _
  %s14 = ssub.s32 1, %s12
  %s15 = scalar_select 0, %s14, %s12
  $region1: #{tpu_custom_call.1} parent=0
    #allocation2 [shape = 'u8[1024]{0}', space=vmem, size = 0x400, scoped, tag = 'input window, operand 0, single buffered']
    #allocation3 [shape = 's32[1]{0}', space=sflag, size = 0x4, scoped, tag = 'scoped memory for tpu_custom_call.1']
    #allocation4 [shape = 's32[1]{0}', space=sflag, size = 0x4, scoped, tag = 'scoped memory for tpu_custom_call.1']
    #allocation5 [shape = 'u8[8192]{0}', space=vmem, size = 0x2000, scoped, tag = 'input window, operand 1, single buffered']
    #allocation6 [shape = 's32[1]{0}', space=sflag, size = 0x4, scoped, tag = 'scoped memory for tpu_custom_call.1']
    #allocation7 [shape = 'u8[131072]{0}', space=vmem, size = 0x20000, scoped, tag = 'input window, operand 3, single buffered']
    #allocation8 [shape = 'u8[65536]{0}', space=vmem, size = 0x10000, scoped, tag = 'input window, operand 5, single buffered']
    #allocation9 [shape = 's32[1]{0}', space=sflag, size = 0x4, scoped, tag = 'scoped memory for tpu_custom_call.1']
    #allocation10 [shape = 'u8[32768]{0}', space=vmem, size = 0x8000, scoped, tag = 'input window, operand 7, single buffered']
    #allocation11 [shape = 'u8[32768]{0}', space=vmem, size = 0x8000, scoped, tag = 'input window, operand 9, single buffered']
    #allocation12 [shape = 's32[1]{0}', space=sflag, size = 0x4, scoped, tag = 'scoped memory for tpu_custom_call.1']
    #allocation13 [shape = 'u8[1024]{0}', space=vmem, size = 0x400, scoped, tag = 'output window, operand 0, single buffered']
    %16 = vsyncpa [#allocation3], 0
    %17 = vsyncpa [#allocation6], 0
    %18 = vsyncpa [#allocation9], 0
    %19 = vsyncpa [#allocation12], 0
    %20 = vsyncpa [#allocation4], 0
    // Predicated region
    $region2: #{tpu_custom_call.1} parent=1 // pred_check
      _
    $region3: #{tpu_custom_call.1} parent=1 // pred_check_branch
      %22 = sbr.rel (0) target = $region5
    $region4: #{tpu_custom_call.1} parent=1 // pred_region
      %s24 = ssub.s32 32, 32
      %25 = vsyncadd [#allocation3], %s24
      %s27 = sshll.u32 [#allocation2], 4
      %s28 = int_to_ptr.vmem [resolvable:$true] %s27
      %30 = dma.hbm_to_vmem [thread:$0]  %s0, 32, %s28, [#allocation3]
    $region5: #{tpu_custom_call.1} parent=1 // pred_fallthru
      _
    // Predicated region
    $region6: #{tpu_custom_call.1} parent=1 // pred_check
      _
    $region7: #{tpu_custom_call.1} parent=1 // pred_check_branch
      %32 = sbr.rel (0) target = $region9
    $region8: #{tpu_custom_call.1} parent=1 // pred_region
      %s34 = ssub.s32 256, 256
      %35 = vsyncadd [#allocation6], %s34
      %s36 = sshll.u32 [#allocation5], 4
      %s37 = int_to_ptr.vmem [resolvable:$true] %s36
      %42 = dma.hbm_to_vmem [thread:$0]  %s1, 256, %s37, [#allocation6], 128, 128, 8
    $region9: #{tpu_custom_call.1} parent=1 // pred_fallthru
      _
    // Predicated region
    $region10: #{tpu_custom_call.1} parent=1 // pred_check
      _
    $region11: #{tpu_custom_call.1} parent=1 // pred_check_branch
      %44 = sbr.rel (0) target = $region13
    $region12: #{tpu_custom_call.1} parent=1 // pred_region
      _
    $region13: #{tpu_custom_call.1} parent=1 // pred_fallthru
      _
    // Predicated region
    $region14: #{tpu_custom_call.1} parent=1 // pred_check
      _
    $region15: #{tpu_custom_call.1} parent=1 // pred_check_branch
      %46 = sbr.rel (0) target = $region17
    $region16: #{tpu_custom_call.1} parent=1 // pred_region
      %s48 = ssub.s32 4096, 4096
      %49 = vsyncadd [#allocation6], %s48
      %s50 = sshll.u32 [#allocation7], 4
      %s51 = int_to_ptr.vmem [resolvable:$true] %s50
      %56 = dma.hbm_to_vmem [thread:$0]  %s3, 4096, %s51, [#allocation6], 128, 128, 8
    $region17: #{tpu_custom_call.1} parent=1 // pred_fallthru
      _
    // Predicated region
    $region18: #{tpu_custom_call.1} parent=1 // pred_check
      _
    $region19: #{tpu_custom_call.1} parent=1 // pred_check_branch
      %58 = sbr.rel (0) target = $region21
    $region20: #{tpu_custom_call.1} parent=1 // pred_region
      _
    $region21: #{tpu_custom_call.1} parent=1 // pred_fallthru
      _
    // Predicated region
    $region22: #{tpu_custom_call.1} parent=1 // pred_check
      _
    $region23: #{tpu_custom_call.1} parent=1 // pred_check_branch
      %60 = sbr.rel (0) target = $region25
    $region24: #{tpu_custom_call.1} parent=1 // pred_region
      %s62 = ssub.s32 2048, 2048
      %63 = vsyncadd [#allocation9], %s62
      %s64 = sshll.u32 [#allocation8], 4
      %s65 = int_to_ptr.vmem [resolvable:$true] %s64
      %70 = dma.hbm_to_vmem [thread:$0]  %s5, 2048, %s65, [#allocation9], 64, 64, 4
    $region25: #{tpu_custom_call.1} parent=1 // pred_fallthru
      _
    // Predicated region
    $region26: #{tpu_custom_call.1} parent=1 // pred_check
      _
    $region27: #{tpu_custom_call.1} parent=1 // pred_check_branch
      %72 = sbr.rel (0) target = $region29
    $region28: #{tpu_custom_call.1} parent=1 // pred_region
      _
    $region29: #{tpu_custom_call.1} parent=1 // pred_fallthru
      _
    // Predicated region
    $region30: #{tpu_custom_call.1} parent=1 // pred_check
      _
    $region31: #{tpu_custom_call.1} parent=1 // pred_check_branch
      %74 = sbr.rel (0) target = $region33
    $region32: #{tpu_custom_call.1} parent=1 // pred_region
      %s76 = ssub.s32 1024, 1024
      %77 = vsyncadd [#allocation9], %s76
      %s78 = sshll.u32 [#allocation10], 4
      %s79 = int_to_ptr.vmem [resolvable:$true] %s78
      %84 = dma.hbm_to_vmem [thread:$0]  %s7, 1024, %s79, [#allocation9], 64, 64, 4
    $region33: #{tpu_custom_call.1} parent=1 // pred_fallthru
      _
    // Predicated region
    $region34: #{tpu_custom_call.1} parent=1 // pred_check
      _
    $region35: #{tpu_custom_call.1} parent=1 // pred_check_branch
      %86 = sbr.rel (0) target = $region37
    $region36: #{tpu_custom_call.1} parent=1 // pred_region
      _
    $region37: #{tpu_custom_call.1} parent=1 // pred_fallthru
      _
    // Predicated region
    $region38: #{tpu_custom_call.1} parent=1 // pred_check
      _
    $region39: #{tpu_custom_call.1} parent=1 // pred_check_branch
      %88 = sbr.rel (0) target = $region41
    $region40: #{tpu_custom_call.1} parent=1 // pred_region
      %s90 = ssub.s32 1024, 1024
      %91 = vsyncadd [#allocation12], %s90
      %s92 = sshll.u32 [#allocation11], 4
      %s93 = int_to_ptr.vmem [resolvable:$true] %s92
      %98 = dma.hbm_to_vmem [thread:$0]  %s9, 1024, %s93, [#allocation12], 64, 64, 4
    $region41: #{tpu_custom_call.1} parent=1 // pred_fallthru
      _
    // Predicated region
    $region42: #{tpu_custom_call.1} parent=1 // pred_check
      _
    $region43: #{tpu_custom_call.1} parent=1 // pred_check_branch
      %100 = sbr.rel (0) target = $region45
    $region44: #{tpu_custom_call.1} parent=1 // pred_region
      _
    $region45: #{tpu_custom_call.1} parent=1 // pred_fallthru
      _
    // Predicated region
    $region46: #{tpu_custom_call.1} parent=1 // pred_check
      _
    $region47: #{tpu_custom_call.1} parent=1 // pred_check_branch
      %102 = sbr.rel (0) target = $region49
    $region48: #{tpu_custom_call.1} parent=1 // pred_region
      %103 = dma.done [#allocation3], 32
    $region49: #{tpu_custom_call.1} parent=1 // pred_fallthru
      _
    // Predicated region
    $region50: #{tpu_custom_call.1} parent=1 // pred_check
      _
    $region51: #{tpu_custom_call.1} parent=1 // pred_check_branch
      %105 = sbr.rel (0) target = $region53
    $region52: #{tpu_custom_call.1} parent=1 // pred_region
      %106 = dma.done [#allocation6], 256
    $region53: #{tpu_custom_call.1} parent=1 // pred_fallthru
      _
    // Predicated region
    $region54: #{tpu_custom_call.1} parent=1 // pred_check
      _
    $region55: #{tpu_custom_call.1} parent=1 // pred_check_branch
      %108 = sbr.rel (0) target = $region57
    $region56: #{tpu_custom_call.1} parent=1 // pred_region
      %109 = dma.done [#allocation6], 4096
    $region57: #{tpu_custom_call.1} parent=1 // pred_fallthru
      _
    // Predicated region
    $region58: #{tpu_custom_call.1} parent=1 // pred_check
      _
    $region59: #{tpu_custom_call.1} parent=1 // pred_check_branch
      %111 = sbr.rel (0) target = $region61
    $region60: #{tpu_custom_call.1} parent=1 // pred_region
      %112 = dma.done [#allocation9], 2048
    $region61: #{tpu_custom_call.1} parent=1 // pred_fallthru
      _
    // Predicated region
    $region62: #{tpu_custom_call.1} parent=1 // pred_check
      _
    $region63: #{tpu_custom_call.1} parent=1 // pred_check_branch
      %114 = sbr.rel (0) target = $region65
    $region64: #{tpu_custom_call.1} parent=1 // pred_region
      %115 = dma.done [#allocation9], 1024
    $region65: #{tpu_custom_call.1} parent=1 // pred_fallthru
      _
    // Predicated region
    $region66: #{tpu_custom_call.1} parent=1 // pred_check
      _
    $region67: #{tpu_custom_call.1} parent=1 // pred_check_branch
      %117 = sbr.rel (0) target = $region69
    $region68: #{tpu_custom_call.1} parent=1 // pred_region
      %118 = dma.done [#allocation12], 1024
    $region69: #{tpu_custom_call.1} parent=1 // pred_fallthru
      _
    %v120 = vld [vmem:[#allocation2] sm:$0x3]
    %v121 = vld [vmem:[#allocation5] sm:$0xff]
    %v122 = vld [vmem:[#allocation5 + $0x8] sm:$0xff]
    %v123 = vld [vmem:[%s2] sm:$0x3]
    %v125 = vlaneseq
    %v126 = vshrl.u32 %v125, 7
    %v127 = vsub.s32 0, %v126
    %v128 = vrot.slane %v123, %v127
    %v129 = vlaneseq
    %v130 = vshrl.u32 %v129, 7
    %v131 = vsub.s32 1, %v130
    %v132 = vrot.slane %v123, %v131
    %v137 = vunpack.c.l.b16 %v121
    %v138 = vunpack.c.h.b16 %v121
    %v139 = vunpack.c.l.b16 %v122
    %v140 = vunpack.c.h.b16 %v122
    %v141 = vpack.c.b16 %v139, %v137
    %v142 = vpack.c.b16 %v140, %v138
    %vm145 = vcmask 130048
    %v147 = vsel %vm145, %v120, 0
    %149 = vmatprep.subr.bf16.mxu0 %v142
    %150 = vmatpush1.bf16.msra.mxu0 %v141
    %151 = vmatprep.subr.bf16.mxu0 0
    %152 = vmatpush1.bf16.msra.mxu0 0
    %153 = vmatprep.subr.bf16.mxu0 0
    %154 = vmatpush1.bf16.msra.mxu0 0
    %155 = vmatprep.subr.bf16.mxu0 0
    %156 = vmatpush1.bf16.msra.mxu0 0
    %157 = vmatprep.subr.bf16.mxu0 0
    %158 = vmatpush1.bf16.msra.mxu0 0
    %159 = vmatprep.subr.bf16.mxu0 0
    %160 = vmatpush1.bf16.msra.mxu0 0
    %161 = vmatprep.subr.bf16.mxu0 0
    %162 = vmatpush1.bf16.msra.mxu0 0
    %163 = vmatprep.subr.bf16.mxu0 0
    %164 = vmatpush1.bf16.msra.mxu0 0
    %165 = vmatprep.subr.bf16.mxu0 0
    %166 = vmatpush1.bf16.msra.mxu0 0
    %167 = vmatprep.subr.bf16.mxu0 0
    %168 = vmatpush1.bf16.msra.mxu0 0
    %169 = vmatprep.subr.bf16.mxu0 0
    %170 = vmatpush1.bf16.msra.mxu0 0
    %171 = vmatprep.subr.bf16.mxu0 0
    %172 = vmatpush1.bf16.msra.mxu0 0
    %173 = vmatprep.subr.bf16.mxu0 0
    %174 = vmatpush1.bf16.msra.mxu0 0
    %175 = vmatprep.subr.bf16.mxu0 0
    %176 = vmatpush1.bf16.msra.mxu0 0
    %177 = vmatprep.subr.bf16.mxu0 0
    %178 = vmatpush1.bf16.msra.mxu0 0
    %179 = vmatprep.subr.bf16.mxu0 0
    %180 = vmatpush1.bf16.msra.mxu0 0
    %181 = vmatprep.mubr.bf16.mxu0 0
    %182 = vmatmul.mubr.bf16.gmra.mrb[0].mxu0 %v147
    %v183 = vpop.f32.mrb[0].mxu0
    %v184 = vadd.f32 %v128, %v183
    %v185 = vpop.f32.mrb[0].mxu0
    %v186 = vadd.f32 %v132, %v185
    %v187 = vpop.f32.mrb[0].mxu0
    %v188 = vpop.f32.mrb[0].mxu0
    %189 = vdwg.mxu0
    %v190 = vmax.f32 %v184, 0.0
    %v191 = vmax.f32 %v186, 0.0
    %v192 = vpack.c.bf16 %v190, %v190
    %v193 = vpack.c.bf16 %v191, %v191
    %v194 = vld [vmem:[#allocation7] sm:$0xff]
    %v195 = vld [vmem:[#allocation7 + $0x8] sm:$0xff]
    %v196 = vld [vmem:[#allocation7 + $0x10] sm:$0xff]
    %v197 = vld [vmem:[#allocation7 + $0x18] sm:$0xff]
    %v198 = vld [vmem:[#allocation7 + $0x20] sm:$0xff]
    %v199 = vld [vmem:[#allocation7 + $0x28] sm:$0xff]
    %v200 = vld [vmem:[#allocation7 + $0x30] sm:$0xff]
    %v201 = vld [vmem:[#allocation7 + $0x38] sm:$0xff]
    %v202 = vld [vmem:[#allocation7 + $0x40] sm:$0xff]
    %v203 = vld [vmem:[#allocation7 + $0x48] sm:$0xff]
    %v204 = vld [vmem:[#allocation7 + $0x50] sm:$0xff]
    %v205 = vld [vmem:[#allocation7 + $0x58] sm:$0xff]
    %v206 = vld [vmem:[#allocation7 + $0x60] sm:$0xff]
    %v207 = vld [vmem:[#allocation7 + $0x68] sm:$0xff]
    %v208 = vld [vmem:[#allocation7 + $0x70] sm:$0xff]
    %v209 = vld [vmem:[#allocation7 + $0x78] sm:$0xff]
    %v210 = vld [vmem:[#allocation7 + $0x80] sm:$0xff]
    %v211 = vld [vmem:[#allocation7 + $0x88] sm:$0xff]
    %v212 = vld [vmem:[#allocation7 + $0x90] sm:$0xff]
    %v213 = vld [vmem:[#allocation7 + $0x98] sm:$0xff]
    %v214 = vld [vmem:[#allocation7 + $0xa0] sm:$0xff]
    %v215 = vld [vmem:[#allocation7 + $0xa8] sm:$0xff]
    %v216 = vld [vmem:[#allocation7 + $0xb0] sm:$0xff]
    %v217 = vld [vmem:[#allocation7 + $0xb8] sm:$0xff]
    %v218 = vld [vmem:[#allocation7 + $0xc0] sm:$0xff]
    %v219 = vld [vmem:[#allocation7 + $0xc8] sm:$0xff]
    %v220 = vld [vmem:[#allocation7 + $0xd0] sm:$0xff]
    %v221 = vld [vmem:[#allocation7 + $0xd8] sm:$0xff]
    %v222 = vld [vmem:[#allocation7 + $0xe0] sm:$0xff]
    %v223 = vld [vmem:[#allocation7 + $0xe8] sm:$0xff]
    %v224 = vld [vmem:[#allocation7 + $0xf0] sm:$0xff]
    %v225 = vld [vmem:[#allocation7 + $0xf8] sm:$0xff]
    %v226 = vld [vmem:[%s4] sm:$0x3]
    %v228 = vlaneseq
    %v229 = vshrl.u32 %v228, 7
    %v230 = vsub.s32 0, %v229
    %v231 = vrot.slane %v226, %v230
    %v232 = vlaneseq
    %v233 = vshrl.u32 %v232, 7
    %v234 = vsub.s32 1, %v233
    %v235 = vrot.slane %v226, %v234
    %v270 = vunpack.c.l.b16 %v194
    %v271 = vunpack.c.h.b16 %v194
    %v272 = vunpack.c.l.b16 %v195
    %v273 = vunpack.c.h.b16 %v195
    %v274 = vunpack.c.l.b16 %v196
    %v275 = vunpack.c.h.b16 %v196
    %v276 = vunpack.c.l.b16 %v197
    %v277 = vunpack.c.h.b16 %v197
    %v278 = vunpack.c.l.b16 %v198
    %v279 = vunpack.c.h.b16 %v198
    %v280 = vunpack.c.l.b16 %v199
    %v281 = vunpack.c.h.b16 %v199
    %v282 = vunpack.c.l.b16 %v200
    %v283 = vunpack.c.h.b16 %v200
    %v284 = vunpack.c.l.b16 %v201
    %v285 = vunpack.c.h.b16 %v201
    %v286 = vunpack.c.l.b16 %v202
    %v287 = vunpack.c.h.b16 %v202
    %v288 = vunpack.c.l.b16 %v203
    %v289 = vunpack.c.h.b16 %v203
    %v290 = vunpack.c.l.b16 %v204
    %v291 = vunpack.c.h.b16 %v204
    %v292 = vunpack.c.l.b16 %v205
    %v293 = vunpack.c.h.b16 %v205
    %v294 = vunpack.c.l.b16 %v206
    %v295 = vunpack.c.h.b16 %v206
    %v296 = vunpack.c.l.b16 %v207
    %v297 = vunpack.c.h.b16 %v207
    %v298 = vunpack.c.l.b16 %v208
    %v299 = vunpack.c.h.b16 %v208
    %v300 = vunpack.c.l.b16 %v209
    %v301 = vunpack.c.h.b16 %v209
    %v302 = vunpack.c.l.b16 %v210
    %v303 = vunpack.c.h.b16 %v210
    %v304 = vunpack.c.l.b16 %v211
    %v305 = vunpack.c.h.b16 %v211
    %v306 = vunpack.c.l.b16 %v212
    %v307 = vunpack.c.h.b16 %v212
    %v308 = vunpack.c.l.b16 %v213
    %v309 = vunpack.c.h.b16 %v213
    %v310 = vunpack.c.l.b16 %v214
    %v311 = vunpack.c.h.b16 %v214
    %v312 = vunpack.c.l.b16 %v215
    %v313 = vunpack.c.h.b16 %v215
    %v314 = vunpack.c.l.b16 %v216
    %v315 = vunpack.c.h.b16 %v216
    %v316 = vunpack.c.l.b16 %v217
    %v317 = vunpack.c.h.b16 %v217
    %v318 = vunpack.c.l.b16 %v218
    %v319 = vunpack.c.h.b16 %v218
    %v320 = vunpack.c.l.b16 %v219
    %v321 = vunpack.c.h.b16 %v219
    %v322 = vunpack.c.l.b16 %v220
    %v323 = vunpack.c.h.b16 %v220
    %v324 = vunpack.c.l.b16 %v221
    %v325 = vunpack.c.h.b16 %v221
    %v326 = vunpack.c.l.b16 %v222
    %v327 = vunpack.c.h.b16 %v222
    %v328 = vunpack.c.l.b16 %v223
    %v329 = vunpack.c.h.b16 %v223
    %v330 = vunpack.c.l.b16 %v224
    %v331 = vunpack.c.h.b16 %v224
    %v332 = vunpack.c.l.b16 %v225
    %v333 = vunpack.c.h.b16 %v225
    %v334 = vpack.c.b16 %v272, %v270
    %v335 = vpack.c.b16 %v273, %v271
    %v336 = vpack.c.b16 %v276, %v274
    %v337 = vpack.c.b16 %v277, %v275
    %v338 = vpack.c.b16 %v280, %v278
    %v339 = vpack.c.b16 %v281, %v279
    %v340 = vpack.c.b16 %v284, %v282
    %v341 = vpack.c.b16 %v285, %v283
    %v342 = vpack.c.b16 %v288, %v286
    %v343 = vpack.c.b16 %v289, %v287
    %v344 = vpack.c.b16 %v292, %v290
    %v345 = vpack.c.b16 %v293, %v291
    %v346 = vpack.c.b16 %v296, %v294
    %v347 = vpack.c.b16 %v297, %v295
    %v348 = vpack.c.b16 %v300, %v298
    %v349 = vpack.c.b16 %v301, %v299
    %v350 = vpack.c.b16 %v304, %v302
    %v351 = vpack.c.b16 %v305, %v303
    %v352 = vpack.c.b16 %v308, %v306
    %v353 = vpack.c.b16 %v309, %v307
    %v354 = vpack.c.b16 %v312, %v310
    %v355 = vpack.c.b16 %v313, %v311
    %v356 = vpack.c.b16 %v316, %v314
    %v357 = vpack.c.b16 %v317, %v315
    %v358 = vpack.c.b16 %v320, %v318
    %v359 = vpack.c.b16 %v321, %v319
    %v360 = vpack.c.b16 %v324, %v322
    %v361 = vpack.c.b16 %v325, %v323
    %v362 = vpack.c.b16 %v328, %v326
    %v363 = vpack.c.b16 %v329, %v327
    %v364 = vpack.c.b16 %v332, %v330
    %v365 = vpack.c.b16 %v333, %v331
    %398 = vmatprep.subr.bf16.mxu0 %v335
    %399 = vmatpush1.bf16.msra.mxu0 %v334
    %400 = vmatprep.subr.bf16.mxu0 %v337
    %401 = vmatpush1.bf16.msra.mxu0 %v336
    %402 = vmatprep.subr.bf16.mxu0 %v339
    %403 = vmatpush1.bf16.msra.mxu0 %v338
    %404 = vmatprep.subr.bf16.mxu0 %v341
    %405 = vmatpush1.bf16.msra.mxu0 %v340
    %406 = vmatprep.subr.bf16.mxu0 %v343
    %407 = vmatpush1.bf16.msra.mxu0 %v342
    %408 = vmatprep.subr.bf16.mxu0 %v345
    %409 = vmatpush1.bf16.msra.mxu0 %v344
    %410 = vmatprep.subr.bf16.mxu0 %v347
    %411 = vmatpush1.bf16.msra.mxu0 %v346
    %412 = vmatprep.subr.bf16.mxu0 %v349
    %413 = vmatpush1.bf16.msra.mxu0 %v348
    %414 = vmatprep.subr.bf16.mxu0 %v351
    %415 = vmatpush1.bf16.msra.mxu0 %v350
    %416 = vmatprep.subr.bf16.mxu0 %v353
    %417 = vmatpush1.bf16.msra.mxu0 %v352
    %418 = vmatprep.subr.bf16.mxu0 %v355
    %419 = vmatpush1.bf16.msra.mxu0 %v354
    %420 = vmatprep.subr.bf16.mxu0 %v357
    %421 = vmatpush1.bf16.msra.mxu0 %v356
    %422 = vmatprep.subr.bf16.mxu0 %v359
    %423 = vmatpush1.bf16.msra.mxu0 %v358
    %424 = vmatprep.subr.bf16.mxu0 %v361
    %425 = vmatpush1.bf16.msra.mxu0 %v360
    %426 = vmatprep.subr.bf16.mxu0 %v363
    %427 = vmatpush1.bf16.msra.mxu0 %v362
    %428 = vmatprep.subr.bf16.mxu0 %v365
    %429 = vmatpush1.bf16.msra.mxu0 %v364
    %430 = vmatprep.mubr.bf16.mxu0 %v193
    %431 = vmatmul.mubr.bf16.gmra.mrb[0].mxu0 %v192
    %v432 = vpop.f32.mrb[0].mxu0
    %v433 = vadd.f32 %v231, %v432
    %v434 = vpop.f32.mrb[0].mxu0
    %v435 = vadd.f32 %v235, %v434
    %v436 = vpop.f32.mrb[0].mxu0
    %v437 = vpop.f32.mrb[0].mxu0
    %438 = vdwg.mxu0
    %v439 = vmax.f32 %v433, 0.0
    %v440 = vmax.f32 %v435, 0.0
    %v441 = vpack.c.bf16 %v439, %v439
    %v442 = vpack.c.bf16 %v440, %v440
    %v443 = vld [vmem:[#allocation8] sm:$0xf]
    %v444 = vld [vmem:[#allocation8 + $0x4] sm:$0xf]
    %v445 = vld [vmem:[#allocation8 + $0x8] sm:$0xf]
    %v446 = vld [vmem:[#allocation8 + $0xc] sm:$0xf]
    %v447 = vld [vmem:[#allocation8 + $0x10] sm:$0xf]
    %v448 = vld [vmem:[#allocation8 + $0x14] sm:$0xf]
    %v449 = vld [vmem:[#allocation8 + $0x18] sm:$0xf]
    %v450 = vld [vmem:[#allocation8 + $0x1c] sm:$0xf]
    %v451 = vld [vmem:[#allocation8 + $0x20] sm:$0xf]
    %v452 = vld [vmem:[#allocation8 + $0x24] sm:$0xf]
    %v453 = vld [vmem:[#allocation8 + $0x28] sm:$0xf]
    %v454 = vld [vmem:[#allocation8 + $0x2c] sm:$0xf]
    %v455 = vld [vmem:[#allocation8 + $0x30] sm:$0xf]
    %v456 = vld [vmem:[#allocation8 + $0x34] sm:$0xf]
    %v457 = vld [vmem:[#allocation8 + $0x38] sm:$0xf]
    %v458 = vld [vmem:[#allocation8 + $0x3c] sm:$0xf]
    %v459 = vld [vmem:[#allocation8 + $0x40] sm:$0xf]
    %v460 = vld [vmem:[#allocation8 + $0x44] sm:$0xf]
    %v461 = vld [vmem:[#allocation8 + $0x48] sm:$0xf]
    %v462 = vld [vmem:[#allocation8 + $0x4c] sm:$0xf]
    %v463 = vld [vmem:[#allocation8 + $0x50] sm:$0xf]
    %v464 = vld [vmem:[#allocation8 + $0x54] sm:$0xf]
    %v465 = vld [vmem:[#allocation8 + $0x58] sm:$0xf]
    %v466 = vld [vmem:[#allocation8 + $0x5c] sm:$0xf]
    %v467 = vld [vmem:[#allocation8 + $0x60] sm:$0xf]
    %v468 = vld [vmem:[#allocation8 + $0x64] sm:$0xf]
    %v469 = vld [vmem:[#allocation8 + $0x68] sm:$0xf]
    %v470 = vld [vmem:[#allocation8 + $0x6c] sm:$0xf]
    %v471 = vld [vmem:[#allocation8 + $0x70] sm:$0xf]
    %v472 = vld [vmem:[#allocation8 + $0x74] sm:$0xf]
    %v473 = vld [vmem:[#allocation8 + $0x78] sm:$0xf]
    %v474 = vld [vmem:[#allocation8 + $0x7c] sm:$0xf]
    %v475 = vld [vmem:[%s6] sm:$0x1]
    %v477 = vlaneseq
    %v478 = vshrl.u32 %v477, 7
    %v479 = vsub.s32 0, %v478
    %v480 = vrot.slane %v475, %v479
    %v514 = vunpack.c.l.b16 %v443
    %v515 = vunpack.c.l.b16 %v444
    %v516 = vunpack.c.l.b16 %v445
    %v517 = vunpack.c.l.b16 %v446
    %v518 = vunpack.c.l.b16 %v447
    %v519 = vunpack.c.l.b16 %v448
    %v520 = vunpack.c.l.b16 %v449
    %v521 = vunpack.c.l.b16 %v450
    %v522 = vunpack.c.l.b16 %v451
    %v523 = vunpack.c.l.b16 %v452
    %v524 = vunpack.c.l.b16 %v453
    %v525 = vunpack.c.l.b16 %v454
    %v526 = vunpack.c.l.b16 %v455
    %v527 = vunpack.c.l.b16 %v456
    %v528 = vunpack.c.l.b16 %v457
    %v529 = vunpack.c.l.b16 %v458
    %v530 = vunpack.c.l.b16 %v459
    %v531 = vunpack.c.l.b16 %v460
    %v532 = vunpack.c.l.b16 %v461
    %v533 = vunpack.c.l.b16 %v462
    %v534 = vunpack.c.l.b16 %v463
    %v535 = vunpack.c.l.b16 %v464
    %v536 = vunpack.c.l.b16 %v465
    %v537 = vunpack.c.l.b16 %v466
    %v538 = vunpack.c.l.b16 %v467
    %v539 = vunpack.c.l.b16 %v468
    %v540 = vunpack.c.l.b16 %v469
    %v541 = vunpack.c.l.b16 %v470
    %v542 = vunpack.c.l.b16 %v471
    %v543 = vunpack.c.l.b16 %v472
    %v544 = vunpack.c.l.b16 %v473
    %v545 = vunpack.c.l.b16 %v474
    %v546 = vpack.c.b16 %v515, %v514
    %v547 = vpack.c.b16 %v517, %v516
    %v548 = vpack.c.b16 %v519, %v518
    %v549 = vpack.c.b16 %v521, %v520
    %v550 = vpack.c.b16 %v523, %v522
    %v551 = vpack.c.b16 %v525, %v524
    %v552 = vpack.c.b16 %v527, %v526
    %v553 = vpack.c.b16 %v529, %v528
    %v554 = vpack.c.b16 %v531, %v530
    %v555 = vpack.c.b16 %v533, %v532
    %v556 = vpack.c.b16 %v535, %v534
    %v557 = vpack.c.b16 %v537, %v536
    %v558 = vpack.c.b16 %v539, %v538
    %v559 = vpack.c.b16 %v541, %v540
    %v560 = vpack.c.b16 %v543, %v542
    %v561 = vpack.c.b16 %v545, %v544
    %578 = vmatprep.subr.bf16.mxu0 0
    %579 = vmatpush1.bf16.msra.mxu0 %v546
    %580 = vmatprep.subr.bf16.mxu0 0
    %581 = vmatpush1.bf16.msra.mxu0 %v547
    %582 = vmatprep.subr.bf16.mxu0 0
    %583 = vmatpush1.bf16.msra.mxu0 %v548
    %584 = vmatprep.subr.bf16.mxu0 0
    %585 = vmatpush1.bf16.msra.mxu0 %v549
    %586 = vmatprep.subr.bf16.mxu0 0
    %587 = vmatpush1.bf16.msra.mxu0 %v550
    %588 = vmatprep.subr.bf16.mxu0 0
    %589 = vmatpush1.bf16.msra.mxu0 %v551
    %590 = vmatprep.subr.bf16.mxu0 0
    %591 = vmatpush1.bf16.msra.mxu0 %v552
    %592 = vmatprep.subr.bf16.mxu0 0
    %593 = vmatpush1.bf16.msra.mxu0 %v553
    %594 = vmatprep.subr.bf16.mxu0 0
    %595 = vmatpush1.bf16.msra.mxu0 %v554
    %596 = vmatprep.subr.bf16.mxu0 0
    %597 = vmatpush1.bf16.msra.mxu0 %v555
    %598 = vmatprep.subr.bf16.mxu0 0
    %599 = vmatpush1.bf16.msra.mxu0 %v556
    %600 = vmatprep.subr.bf16.mxu0 0
    %601 = vmatpush1.bf16.msra.mxu0 %v557
    %602 = vmatprep.subr.bf16.mxu0 0
    %603 = vmatpush1.bf16.msra.mxu0 %v558
    %604 = vmatprep.subr.bf16.mxu0 0
    %605 = vmatpush1.bf16.msra.mxu0 %v559
    %606 = vmatprep.subr.bf16.mxu0 0
    %607 = vmatpush1.bf16.msra.mxu0 %v560
    %608 = vmatprep.subr.bf16.mxu0 0
    %609 = vmatpush1.bf16.msra.mxu0 %v561
    %610 = vmatprep.mubr.bf16.mxu0 %v442
    %611 = vmatmul.mubr.bf16.gmra.mrb[0].mxu0 %v441
    %v612 = vpop.f32.mrb[0].mxu0
    %v613 = vadd.f32 %v480, %v612
    %v614 = vpop.f32.mrb[0].mxu0
    %v615 = vpop.f32.mrb[0].mxu0
    %v616 = vpop.f32.mrb[0].mxu0
    %617 = vdwg.mxu0
    %v618 = vmax.f32 %v613, 0.0
    %v619 = vpack.c.bf16 %v618, %v618
    %v620 = vld [vmem:[#allocation10] sm:$0xf]
    %v621 = vld [vmem:[#allocation10 + $0x4] sm:$0xf]
    %v622 = vld [vmem:[#allocation10 + $0x8] sm:$0xf]
    %v623 = vld [vmem:[#allocation10 + $0xc] sm:$0xf]
    %v624 = vld [vmem:[#allocation10 + $0x10] sm:$0xf]
    %v625 = vld [vmem:[#allocation10 + $0x14] sm:$0xf]
    %v626 = vld [vmem:[#allocation10 + $0x18] sm:$0xf]
    %v627 = vld [vmem:[#allocation10 + $0x1c] sm:$0xf]
    %v628 = vld [vmem:[#allocation10 + $0x20] sm:$0xf]
    %v629 = vld [vmem:[#allocation10 + $0x24] sm:$0xf]
    %v630 = vld [vmem:[#allocation10 + $0x28] sm:$0xf]
    %v631 = vld [vmem:[#allocation10 + $0x2c] sm:$0xf]
    %v632 = vld [vmem:[#allocation10 + $0x30] sm:$0xf]
    %v633 = vld [vmem:[#allocation10 + $0x34] sm:$0xf]
    %v634 = vld [vmem:[#allocation10 + $0x38] sm:$0xf]
    %v635 = vld [vmem:[#allocation10 + $0x3c] sm:$0xf]
    %v636 = vld [vmem:[%s8] sm:$0x1]
    %v638 = vlaneseq
    %v639 = vshrl.u32 %v638, 7
    %v640 = vsub.s32 0, %v639
    %v641 = vrot.slane %v636, %v640
    %v659 = vunpack.c.l.b16 %v620
    %v660 = vunpack.c.l.b16 %v621
    %v661 = vunpack.c.l.b16 %v622
    %v662 = vunpack.c.l.b16 %v623
    %v663 = vunpack.c.l.b16 %v624
    %v664 = vunpack.c.l.b16 %v625
    %v665 = vunpack.c.l.b16 %v626
    %v666 = vunpack.c.l.b16 %v627
    %v667 = vunpack.c.l.b16 %v628
    %v668 = vunpack.c.l.b16 %v629
    %v669 = vunpack.c.l.b16 %v630
    %v670 = vunpack.c.l.b16 %v631
    %v671 = vunpack.c.l.b16 %v632
    %v672 = vunpack.c.l.b16 %v633
    %v673 = vunpack.c.l.b16 %v634
    %v674 = vunpack.c.l.b16 %v635
    %v675 = vpack.c.b16 %v660, %v659
    %v676 = vpack.c.b16 %v662, %v661
    %v677 = vpack.c.b16 %v664, %v663
    %v678 = vpack.c.b16 %v666, %v665
    %v679 = vpack.c.b16 %v668, %v667
    %v680 = vpack.c.b16 %v670, %v669
    %v681 = vpack.c.b16 %v672, %v671
    %v682 = vpack.c.b16 %v674, %v673
    %691 = vmatprep.subr.bf16.mxu0 0
    %692 = vmatpush1.bf16.msra.mxu0 %v675
    %693 = vmatprep.subr.bf16.mxu0 0
    %694 = vmatpush1.bf16.msra.mxu0 %v676
    %695 = vmatprep.subr.bf16.mxu0 0
    %696 = vmatpush1.bf16.msra.mxu0 %v677
    %697 = vmatprep.subr.bf16.mxu0 0
    %698 = vmatpush1.bf16.msra.mxu0 %v678
    %699 = vmatprep.subr.bf16.mxu0 0
    %700 = vmatpush1.bf16.msra.mxu0 %v679
    %701 = vmatprep.subr.bf16.mxu0 0
    %702 = vmatpush1.bf16.msra.mxu0 %v680
    %703 = vmatprep.subr.bf16.mxu0 0
    %704 = vmatpush1.bf16.msra.mxu0 %v681
    %705 = vmatprep.subr.bf16.mxu0 0
    %706 = vmatpush1.bf16.msra.mxu0 %v682
    %707 = vmatprep.subr.bf16.mxu0 0
    %708 = vmatpush1.bf16.msra.mxu0 0
    %709 = vmatprep.subr.bf16.mxu0 0
    %710 = vmatpush1.bf16.msra.mxu0 0
    %711 = vmatprep.subr.bf16.mxu0 0
    %712 = vmatpush1.bf16.msra.mxu0 0
    %713 = vmatprep.subr.bf16.mxu0 0
    %714 = vmatpush1.bf16.msra.mxu0 0
    %715 = vmatprep.subr.bf16.mxu0 0
    %716 = vmatpush1.bf16.msra.mxu0 0
    %717 = vmatprep.subr.bf16.mxu0 0
    %718 = vmatpush1.bf16.msra.mxu0 0
    %719 = vmatprep.subr.bf16.mxu0 0
    %720 = vmatpush1.bf16.msra.mxu0 0
    %721 = vmatprep.subr.bf16.mxu0 0
    %722 = vmatpush1.bf16.msra.mxu0 0
    %723 = vmatprep.mubr.bf16.mxu0 0
    %724 = vmatmul.mubr.bf16.gmra.mrb[0].mxu0 %v619
    %v725 = vpop.f32.mrb[0].mxu0
    %v726 = vadd.f32 %v641, %v725
    %v727 = vpop.f32.mrb[0].mxu0
    %v728 = vpop.f32.mrb[0].mxu0
    %v729 = vpop.f32.mrb[0].mxu0
    %730 = vdwg.mxu0
    %v731 = vmax.f32 %v726, 0.0
    %v732 = vpack.c.bf16 %v731, %v731
    %v733 = vld [vmem:[#allocation11] sm:$0xf]
    %v734 = vld [vmem:[#allocation11 + $0x4] sm:$0xf]
    %v735 = vld [vmem:[#allocation11 + $0x8] sm:$0xf]
    %v736 = vld [vmem:[#allocation11 + $0xc] sm:$0xf]
    %v737 = vld [vmem:[#allocation11 + $0x10] sm:$0xf]
    %v738 = vld [vmem:[#allocation11 + $0x14] sm:$0xf]
    %v739 = vld [vmem:[#allocation11 + $0x18] sm:$0xf]
    %v740 = vld [vmem:[#allocation11 + $0x1c] sm:$0xf]
    %v741 = vld [vmem:[#allocation11 + $0x20] sm:$0xf]
    %v742 = vld [vmem:[#allocation11 + $0x24] sm:$0xf]
    %v743 = vld [vmem:[#allocation11 + $0x28] sm:$0xf]
    %v744 = vld [vmem:[#allocation11 + $0x2c] sm:$0xf]
    %v745 = vld [vmem:[#allocation11 + $0x30] sm:$0xf]
    %v746 = vld [vmem:[#allocation11 + $0x34] sm:$0xf]
    %v747 = vld [vmem:[#allocation11 + $0x38] sm:$0xf]
    %v748 = vld [vmem:[#allocation11 + $0x3c] sm:$0xf]
    %v749 = vld [vmem:[%s10] sm:$0x1]
    %v751 = vlaneseq
    %v752 = vshrl.u32 %v751, 7
    %v753 = vsub.s32 0, %v752
    %v754 = vrot.slane %v749, %v753
    %v772 = vunpack.c.l.b16 %v733
    %v773 = vunpack.c.l.b16 %v734
    %v774 = vunpack.c.l.b16 %v735
    %v775 = vunpack.c.l.b16 %v736
    %v776 = vunpack.c.l.b16 %v737
    %v777 = vunpack.c.l.b16 %v738
    %v778 = vunpack.c.l.b16 %v739
    %v779 = vunpack.c.l.b16 %v740
    %v780 = vunpack.c.l.b16 %v741
    %v781 = vunpack.c.l.b16 %v742
    %v782 = vunpack.c.l.b16 %v743
    %v783 = vunpack.c.l.b16 %v744
    %v784 = vunpack.c.l.b16 %v745
    %v785 = vunpack.c.l.b16 %v746
    %v786 = vunpack.c.l.b16 %v747
    %v787 = vunpack.c.l.b16 %v748
    %v788 = vpack.c.b16 %v773, %v772
    %v789 = vpack.c.b16 %v775, %v774
    %v790 = vpack.c.b16 %v777, %v776
    %v791 = vpack.c.b16 %v779, %v778
    %v792 = vpack.c.b16 %v781, %v780
    %v793 = vpack.c.b16 %v783, %v782
    %v794 = vpack.c.b16 %v785, %v784
    %v795 = vpack.c.b16 %v787, %v786
    %804 = vmatprep.subr.bf16.mxu0 0
    %805 = vmatpush1.bf16.msra.mxu0 %v788
    %806 = vmatprep.subr.bf16.mxu0 0
    %807 = vmatpush1.bf16.msra.mxu0 %v789
    %808 = vmatprep.subr.bf16.mxu0 0
    %809 = vmatpush1.bf16.msra.mxu0 %v790
    %810 = vmatprep.subr.bf16.mxu0 0
    %811 = vmatpush1.bf16.msra.mxu0 %v791
    %812 = vmatprep.subr.bf16.mxu0 0
    %813 = vmatpush1.bf16.msra.mxu0 %v792
    %814 = vmatprep.subr.bf16.mxu0 0
    %815 = vmatpush1.bf16.msra.mxu0 %v793
    %816 = vmatprep.subr.bf16.mxu0 0
    %817 = vmatpush1.bf16.msra.mxu0 %v794
    %818 = vmatprep.subr.bf16.mxu0 0
    %819 = vmatpush1.bf16.msra.mxu0 %v795
    %820 = vmatprep.subr.bf16.mxu0 0
    %821 = vmatpush1.bf16.msra.mxu0 0
    %822 = vmatprep.subr.bf16.mxu0 0
    %823 = vmatpush1.bf16.msra.mxu0 0
    %824 = vmatprep.subr.bf16.mxu0 0
    %825 = vmatpush1.bf16.msra.mxu0 0
    %826 = vmatprep.subr.bf16.mxu0 0
    %827 = vmatpush1.bf16.msra.mxu0 0
    %828 = vmatprep.subr.bf16.mxu0 0
    %829 = vmatpush1.bf16.msra.mxu0 0
    %830 = vmatprep.subr.bf16.mxu0 0
    %831 = vmatpush1.bf16.msra.mxu0 0
    %832 = vmatprep.subr.bf16.mxu0 0
    %833 = vmatpush1.bf16.msra.mxu0 0
    %834 = vmatprep.subr.bf16.mxu0 0
    %835 = vmatpush1.bf16.msra.mxu0 0
    %836 = vmatprep.mubr.bf16.mxu0 0
    %837 = vmatmul.mubr.bf16.gmra.mrb[0].mxu0 %v732
    %v838 = vpop.f32.mrb[0].mxu0
    %v839 = vadd.f32 %v754, %v838
    %v840 = vpop.f32.mrb[0].mxu0
    %v841 = vpop.f32.mrb[0].mxu0
    %v842 = vpop.f32.mrb[0].mxu0
    %843 = vdwg.mxu0
    %v844 = vpack.c.bf16 %v839, %v839
    %845 = vst [vmem:[#allocation13] sm:$0x3] %v844
    // Predicated region
    $region70: #{tpu_custom_call.1} parent=1 // pred_check
      _
    $region71: #{tpu_custom_call.1} parent=1 // pred_check_branch
      %847 = sbr.rel (0) target = $region73
    $region72: #{tpu_custom_call.1} parent=1 // pred_region
      %s849 = ssub.s32 32, 32
      %850 = vsyncadd [#allocation4], %s849
      %s852 = sshll.u32 [#allocation13], 4
      %s853 = int_to_ptr.vmem [resolvable:$true] %s852
      %855 = dma.vmem_to_hbm [thread:$0]  %s853, 32, %s11, [#allocation4]
    $region73: #{tpu_custom_call.1} parent=1 // pred_fallthru
      _
    // Predicated region
    $region74: #{tpu_custom_call.1} parent=1 // pred_check
      _
    $region75: #{tpu_custom_call.1} parent=1 // pred_check_branch
      %857 = sbr.rel (0) target = $region77
    $region76: #{tpu_custom_call.1} parent=1 // pred_region
      %858 = dma.done [#allocation4], 32
    $region77: #{tpu_custom_call.1} parent=1 // pred_fallthru
      _
    %859 = vsyncpa [#allocation3], 1
    %860 = vsyncpa [#allocation6], 1
    %861 = vsyncpa [#allocation9], 1
    %862 = vsyncpa [#allocation12], 1
    %863 = vsyncpa [#allocation4], 1

</llo_original>
